<compile_context>
chip_gen: v7x
topology: tpu7x:2x2x1
jax: 0.10.0
libtpu: 0.0.40
codegen_flags: <defaults>
</compile_context>

<pallas_src>
import jax
import jax.numpy as jnp
from jax.experimental import pallas as pl
from jax.experimental.pallas import tpu as pltpu


def _drop_path_kernel(x_ref, s_ref, o_ref):
    # x_ref: (TR, TC)   s_ref: (TR, 1)   o_ref: (TR, TC)
    o_ref[...] = x_ref[...] * s_ref[...]          # lane-broadcast multiply (VPU)


def _pick_view(batch, per_sample):
    """Choose a (rows, cols) row-major view of x with lane-dense cols."""
    for c in (2048, 1024, 512, 256, 128):
        if per_sample % c == 0:
            reps = per_sample // c
            return batch * reps, c, reps
    # Fallback: one row per sample; a block spanning the full last dim is
    # always legal even if it is not a multiple of 128.
    return batch, per_sample, 1


def _apply_per_sample_scale(x, scale_b, *, target_block_bytes=4 << 20):
    """y = x * scale_b[batch], scale broadcast over all non-batch dims."""
    batch = x.shape[0]
    per_sample = 1
    for d in x.shape[1:]:
        per_sample *= d

    rows, cols, reps = _pick_view(batch, per_sample)
    x2 = x.reshape(rows, cols)                    # pure row-major view, no copy
    s2 = jnp.repeat(scale_b.astype(x.dtype), reps).reshape(rows, 1)

    itemsize = jnp.dtype(x.dtype).itemsize

    # Column tile: full width when modest, else 128-multiple chunks (ragged OK).
    tile_c = cols if cols <= 2048 else 2048

    # Row tile: ~target_block_bytes per input buffer, multiple of 8 or the full
    # row count, so the (8, 128) block constraint always holds.
    max_r = max(1, target_block_bytes // (tile_c * itemsize))
    if rows <= max_r:
        tile_r = rows
    else:
        tile_r = min(max(8, (max_r // 8) * 8), rows)

    grid = (pl.cdiv(rows, tile_r), pl.cdiv(cols, tile_c))

    y2 = pl.pallas_call(
        _drop_path_kernel,
        out_shape=jax.ShapeDtypeStruct((rows, cols), x.dtype),
        grid_spec=pltpu.PrefetchScalarGridSpec(
            num_scalar_prefetch=0,
            grid=grid,
            in_specs=[
                pl.BlockSpec((tile_r, tile_c), lambda i, j: (i, j)),
                pl.BlockSpec((tile_r, 1), lambda i, j: (i, 0)),
            ],
            out_specs=pl.BlockSpec((tile_r, tile_c), lambda i, j: (i, j)),
        ),
        compiler_params=pltpu.CompilerParams(
            dimension_semantics=("parallel", "parallel")),
    )(x2, s2)

    return y2.reshape(x.shape)


def _per_sample_scale(key, batch, drop_prob, dtype):
    """Per-sample scale: 0 with prob drop_prob, 1/keep_prob otherwise."""
    keep_prob = 1.0 - drop_prob
    u = jax.random.uniform(key, (batch,), dtype=jnp.float32)
    mask = jnp.floor(keep_prob + u)               # exactly the PyTorch recipe
    return (mask / keep_prob).astype(dtype)


def drop_path(x, drop_prob=0.0, *, training=False, key=None,
              target_block_bytes=4 << 20):
    """Pallas DropPath with identical forward semantics to the PyTorch module."""
    if drop_prob == 0.0 or not training:
        return x                                  # identity path (eval / p == 0)
    if key is None:
        raise ValueError("drop_path(training=True, drop_prob>0) needs a PRNG key")
    scale_b = _per_sample_scale(key, x.shape[0], drop_prob, x.dtype)
    return _apply_per_sample_scale(x, scale_b,
                                   target_block_bytes=target_block_bytes)


if __name__ == "__main__":
    root = jax.random.PRNGKey(0)
    k_x, k_drop, k_x2, k_x3 = jax.random.split(root, 4)

    # PDFormer-style activations: (batch, time, num_nodes, dim)
    B, T, N, D = 2, 8, 16, 32
    drop_prob = 0.25
    x = jax.random.normal(k_x, (B, T, N, D), dtype=jnp.float32)

    # Training path: Pallas kernel applies the per-sample keep/drop scale.
    y = drop_path(x, drop_prob, training=True, key=k_drop)
    y = jax.block_until_ready(y)

    scale_b = _per_sample_scale(k_drop, B, drop_prob, x.dtype)
    y_ref = x * scale_b.reshape(B, 1, 1, 1)
    assert y.shape == x.shape, y.shape
    assert jnp.allclose(y, y_ref, atol=1e-6, rtol=1e-6)

    # Eval / drop_prob == 0 paths are the exact identity, as in PyTorch.
    assert jnp.array_equal(drop_path(x, drop_prob, training=False), x)
    assert jnp.array_equal(drop_path(x, 0.0, training=True, key=k_drop), x)

    # Fallback layout: per-sample size (5*7*12 = 420) not a multiple of 128.
    xb = jax.random.normal(k_x2, (3, 5, 7, 12), dtype=jnp.float32)
    yb = jax.block_until_ready(drop_path(xb, 0.5, training=True, key=k_drop))
    sb = _per_sample_scale(k_drop, 3, 0.5, xb.dtype)
    assert jnp.allclose(yb, xb * sb.reshape(3, 1, 1, 1), atol=1e-6, rtol=1e-6)

    # Ragged row-grid path: small block budget forces uneven row blocks.
    xc = jax.random.normal(k_x3, (5, 4, 8, 256), dtype=jnp.float32)
    yc = jax.block_until_ready(
        drop_path(xc, 0.25, training=True, key=k_drop,
                  target_block_bytes=64 << 10))
    sc = _per_sample_scale(k_drop, 5, 0.25, xc.dtype)
    assert jnp.allclose(yc, xc * sc.reshape(5, 1, 1, 1), atol=1e-6, rtol=1e-6)

    print("KERNEL_OK")
</pallas_src>

<mosaic_0001>
module attributes {stable_mosaic.version = 11 : i64} {
  func.func @_drop_path_kernel(%arg0: i32, %arg1: i32, %arg2: memref<4x2048xf32, #tpu.memory_space<vmem>>, %arg3: memref<4x1xf32, #tpu.memory_space<vmem>>, %arg4: memref<4x2048xf32, #tpu.memory_space<vmem>>) attributes {dimension_semantics = [#tpu.dimension_semantics<parallel>, #tpu.dimension_semantics<parallel>], iteration_bounds = array<i64: 1, 1>, scalar_prefetch = 0 : i64, scratch_operands = 0 : i64, tpu.core_type = #tpu.core_type<tc>, window_params = [{transform_indices = @transform_0, window_bounds = array<i64: 4, 2048>}, {transform_indices = @transform_1, window_bounds = array<i64: 4, 1>}, {transform_indices = @transform_2, window_bounds = array<i64: 4, 2048>}]} {
    %c0 = arith.constant 0 : index
    %c0_0 = arith.constant 0 : index
    %0 = vector.load %arg2[%c0, %c0_0] : memref<4x2048xf32, #tpu.memory_space<vmem>>, vector<4x2048xf32>
    %c0_1 = arith.constant 0 : index
    %c0_2 = arith.constant 0 : index
    %1 = vector.load %arg3[%c0_1, %c0_2] : memref<4x1xf32, #tpu.memory_space<vmem>>, vector<4x1xf32>
    %2 = vector.broadcast %1 : vector<4x1xf32> to vector<4x2048xf32>
    %3 = arith.mulf %0, %2 : vector<4x2048xf32>
    %c0_3 = arith.constant 0 : index
    %c0_4 = arith.constant 0 : index
    %4 = vector.load %arg4[%c0_3, %c0_4] : memref<4x2048xf32, #tpu.memory_space<vmem>>, vector<4x2048xf32>
    tpu.vector_store %arg4[%c0_3, %c0_4], %3 {strides = array<i32>} : memref<4x2048xf32, #tpu.memory_space<vmem>>, vector<4x2048xf32>,
    return
  }
  func.func @transform_0(%arg0: i32, %arg1: i32) -> (i32, i32) {
    %c0_i32 = arith.constant 0 : i32
    return %arg0, %arg1 : i32, i32
  }
  func.func @transform_1(%arg0: i32, %arg1: i32) -> (i32, i32) {
    %c0_i32 = arith.constant 0 : i32
    %c0_i32_0 = arith.constant 0 : i32
    return %arg0, %c0_i32 : i32, i32
  }
  func.func @transform_2(%arg0: i32, %arg1: i32) -> (i32, i32) {
    %c0_i32 = arith.constant 0 : i32
    return %arg0, %arg1 : i32, i32
  }
}

</mosaic_0001>

<llo_original>
// kernel: tpu_custom_call.1
$region0: #{tpu_custom_call.1}
  #allocation0 [shape = 'u32[]', space=smem, size = 0x4, offset = 0x4, fixed_abs, tag = 'smem constant byte address 0x4 - core index']
  #allocation1 [shape = 'u32[144,128]{1,0:T(1,128)}', space=vmem, size = 0x12000, scoped, tag = 'internal scratch']
  %s0 = inlined_call_operand.hbm [shape: f32[4,2048], index: 0, kind: input, shape index: {}]
  %s1 = inlined_call_operand.vmem [shape: f32[4,1], index: 1, kind: input, shape index: {}]
  %s2 = inlined_call_operand.hbm [shape: f32[4,2048], index: 2, kind: output, shape index: {}]
  %s3 = sld [smem:[#allocation0]]
  $region22: #{tpu_custom_call.1} parent=0
    _
  %s5 = ssub.s32 1, %s3
  %s6 = scalar_select 0, %s5, %s3
  $region1: #{tpu_custom_call.1} parent=0
    #allocation2 [shape = 'u8[32768]{0}', space=vmem, size = 0x8000, scoped, tag = 'input window, operand 0, single buffered']
    #allocation3 [shape = 's32[1]{0}', space=sflag, size = 0x4, scoped, tag = 'scoped memory for tpu_custom_call.1']
    #allocation4 [shape = 's32[1]{0}', space=sflag, size = 0x4, scoped, tag = 'scoped memory for tpu_custom_call.1']
    #allocation5 [shape = 'u8[32768]{0}', space=vmem, size = 0x8000, scoped, tag = 'output window, operand 0, single buffered']
    %7 = vsyncpa [#allocation3], 0
    %8 = vsyncpa [#allocation4], 0
    // Predicated region
    $region2: #{tpu_custom_call.1} parent=1 // pred_check
      _
    $region3: #{tpu_custom_call.1} parent=1 // pred_check_branch
      %10 = sbr.rel (0) target = $region5
    $region4: #{tpu_custom_call.1} parent=1 // pred_region
      %s12 = ssub.s32 1024, 1024
      %13 = vsyncadd [#allocation3], %s12
      %s15 = sshll.u32 [#allocation2], 4
      %s16 = int_to_ptr.vmem [resolvable:$true] %s15
      %18 = dma.hbm_to_vmem [thread:$0]  %s0, 1024, %s16, [#allocation3]
    $region5: #{tpu_custom_call.1} parent=1 // pred_fallthru
      _
    // Predicated region
    $region6: #{tpu_custom_call.1} parent=1 // pred_check
      _
    $region7: #{tpu_custom_call.1} parent=1 // pred_check_branch
      %20 = sbr.rel (0) target = $region9
    $region8: #{tpu_custom_call.1} parent=1 // pred_region
      _
    $region9: #{tpu_custom_call.1} parent=1 // pred_fallthru
      _
    // Predicated region
    $region10: #{tpu_custom_call.1} parent=1 // pred_check
      _
    $region11: #{tpu_custom_call.1} parent=1 // pred_check_branch
      %22 = sbr.rel (0) target = $region13
    $region12: #{tpu_custom_call.1} parent=1 // pred_region
      %23 = dma.done [#allocation3], 1024
    $region13: #{tpu_custom_call.1} parent=1 // pred_fallthru
      _
    %v24 = vld [vmem:[#allocation2] sm:$0xff]
    %v25 = vld [vmem:[#allocation2 + $0x8] sm:$0xff]
    %v26 = vld [vmem:[#allocation2 + $0x10] sm:$0xff]
    %v27 = vld [vmem:[#allocation2 + $0x18] sm:$0xff]
    %v28 = vld [vmem:[#allocation2 + $0x20] sm:$0xff]
    %v29 = vld [vmem:[#allocation2 + $0x28] sm:$0xff]
    %v30 = vld [vmem:[#allocation2 + $0x30] sm:$0xff]
    %v31 = vld [vmem:[#allocation2 + $0x38] sm:$0xff]
    %v32 = vld [vmem:[%s1] sm:$0xf]
    %34 = vset.pattern.permute.xlu0 0
    %35 = vperm.xlu0 %34, %v32
    %v36 = vpop.permute.xlu0 %35
    %v38 = vunpack.c.l.s4 839922192
    %v39 = vunpack.c.0.s8 %v38
    %v40 = vlaneseq
    %v41 = vshrl.u32 %v40, 7
    %v42 = vsub.s32 %v39, %v41
    %v43 = vrot.slane %v36, %v42
    %v45 = vmul.f32 %v24, %v43
    %v46 = vmul.f32 %v25, %v43
    %v47 = vmul.f32 %v26, %v43
    %v48 = vmul.f32 %v27, %v43
    %v49 = vmul.f32 %v28, %v43
    %v50 = vmul.f32 %v29, %v43
    %v51 = vmul.f32 %v30, %v43
    %v52 = vmul.f32 %v31, %v43
    %53 = vst [vmem:[#allocation5] sm:$0xff] %v45
    %54 = vst [vmem:[#allocation5 + $0x8] sm:$0xff] %v46
    %55 = vst [vmem:[#allocation5 + $0x10] sm:$0xff] %v47
    %56 = vst [vmem:[#allocation5 + $0x18] sm:$0xff] %v48
    %57 = vst [vmem:[#allocation5 + $0x20] sm:$0xff] %v49
    %58 = vst [vmem:[#allocation5 + $0x28] sm:$0xff] %v50
    %59 = vst [vmem:[#allocation5 + $0x30] sm:$0xff] %v51
    %60 = vst [vmem:[#allocation5 + $0x38] sm:$0xff] %v52
    // Predicated region
    $region14: #{tpu_custom_call.1} parent=1 // pred_check
      _
    $region15: #{tpu_custom_call.1} parent=1 // pred_check_branch
      %62 = sbr.rel (0) target = $region17
    $region16: #{tpu_custom_call.1} parent=1 // pred_region
      %s64 = ssub.s32 1024, 1024
      %65 = vsyncadd [#allocation4], %s64
      %s67 = sshll.u32 [#allocation5], 4
      %s68 = int_to_ptr.vmem [resolvable:$true] %s67
      %70 = dma.vmem_to_hbm [thread:$0]  %s68, 1024, %s2, [#allocation4]
    $region17: #{tpu_custom_call.1} parent=1 // pred_fallthru
      _
    // Predicated region
    $region18: #{tpu_custom_call.1} parent=1 // pred_check
      _
    $region19: #{tpu_custom_call.1} parent=1 // pred_check_branch
      %72 = sbr.rel (0) target = $region21
    $region20: #{tpu_custom_call.1} parent=1 // pred_region
      %73 = dma.done [#allocation4], 1024
    $region21: #{tpu_custom_call.1} parent=1 // pred_fallthru
      _
    %74 = vsyncpa [#allocation3], 1
    %75 = vsyncpa [#allocation4], 1

</llo_original>
